<compile_context>
chip_gen: v7x
topology: tpu7x:2x2x1
jax: 0.10.0
libtpu: 0.0.40
codegen_flags: <defaults>
</compile_context>

<pallas_src>
import jax
import jax.numpy as jnp
from jax.experimental import pallas as pl
from jax.experimental.pallas import tpu as pltpu


def _round_up(n, m):
    return ((n + m - 1) // m) * m


def _default_vmem_budget():
    """~70% of per-core VMEM capacity; generation aware, 32 MiB safe fallback."""
    try:
        cap = pltpu.get_tpu_info().vmem_capacity_bytes
        if cap and cap > 0:
            return int(cap * 0.7)
    except Exception:
        pass
    return 32 * 1024 * 1024


# -----------------------------------------------------------------------------
# Kernels
# -----------------------------------------------------------------------------
def mlp_resident_kernel(x_ref, w1_ref, b1_ref, w2_ref, b2_ref, o_ref):
    """Both weight matrices VMEM-resident; the grid tiles batch rows only."""
    # In-kernel cast to the MXU compute dtype (saves a wrapper HBM pass on x).
    x = x_ref[...].astype(w1_ref.dtype)
    h = jnp.dot(x, w1_ref[...], preferred_element_type=jnp.float32)
    # Bias + ReLU in f32 (v5e VPU/EUP have no bf16 path).
    # TODO(synk): nn.Dropout in training mode would need pltpu.prng_seed /
    # prng_random_bits masking; eval-mode dropout is the identity (done here).
    h = jnp.maximum(h + b1_ref[...], 0.0)
    out = jnp.dot(h.astype(w2_ref.dtype), w2_ref[...],
                  preferred_element_type=jnp.float32)
    # o_ref is f32 and lane-dense (multiple of 128) -> unmasked full-lane store.
    o_ref[...] = out + b2_ref[...]


def mlp_stream_kernel(x_ref, w1_ref, b1_ref, w2_ref, b2_ref, o_ref, acc_ref):
    """Streamed-weights fallback: hidden dim tiled as a trailing reduction axis.

    out = sum_h relu(x @ W1[:, h_tile] + b1[h_tile]) @ W2[h_tile, :]  (+ b2)
    (valid because ReLU is elementwise per hidden unit).
    """
    h_idx = pl.program_id(1)

    @pl.when(h_idx == 0)
    def _():
        acc_ref[...] = jnp.zeros_like(acc_ref)

    x = x_ref[...].astype(w1_ref.dtype)
    hid = jnp.dot(x, w1_ref[...], preferred_element_type=jnp.float32)
    hid = jnp.maximum(hid + b1_ref[...], 0.0)
    acc_ref[...] += jnp.dot(hid.astype(w2_ref.dtype), w2_ref[...],
                            preferred_element_type=jnp.float32)

    @pl.when(h_idx == pl.num_programs(1) - 1)
    def _():
        o_ref[...] = acc_ref[...] + b2_ref[...]


# -----------------------------------------------------------------------------
# One-time parameter preparation (pad + cast outside the per-step path)
# -----------------------------------------------------------------------------
def prepare_mlp_params(w1, b1, w2, b2, *, compute_dtype=jnp.bfloat16,
                       vmem_budget=None, force_stream=False, t_hid=None):
    """Pad weights/biases lane-dense (multiples of 128) and cast to the MXU
    dtype ONCE; decide the execution mode (resident vs streamed hidden)."""
    dim_in, dim_hidden = w1.shape
    dim_out = w2.shape[1]
    if vmem_budget is None:
        vmem_budget = _default_vmem_budget()

    d_in_p = _round_up(dim_in, 128)
    d_hid_p = _round_up(dim_hidden, 128)
    d_out_p = _round_up(dim_out, 128)
    wsize = jnp.dtype(compute_dtype).itemsize

    # Pallas double-buffers every input by default (even with a constant
    # index_map), so resident weights/biases cost 2x their size in VMEM.
    resident_weight_bytes = 2 * ((d_in_p * d_hid_p + d_hid_p * d_out_p) * wsize
                                 + (d_hid_p + d_out_p) * 4)
    per_row_resident = (2 * d_in_p * 4            # double-buffered f32 x block
                        + 2 * d_out_p * 4         # double-buffered f32 out block
                        + d_hid_p * (4 + wsize)   # f32 hidden + compute-dtype copy
                        + d_out_p * 4)            # f32 matmul result
    resident_tm_cap = (vmem_budget - resident_weight_bytes) // per_row_resident

    mode = "stream" if (force_stream or resident_tm_cap < 128) else "resident"

    if mode == "stream":
        # Stream W1 column-tiles / W2 row-tiles over a trailing hidden grid axis.
        if t_hid is None:
            tile_budget = vmem_budget // 2
            per_hid = 2 * ((d_in_p + d_out_p) * wsize + 4)
            t_hid = max(128, (tile_budget // per_hid) // 128 * 128)
        t_hid = int(min(t_hid, d_hid_p))
        # Keep padded hidden an exact multiple of t_hid so no ragged
        # (garbage-filled) weight block ever feeds the MXU.
        d_hid_p = _round_up(d_hid_p, t_hid)
        # TODO(synk): if d_in_p is itself too large for a (d_in_p, t_hid) tile,
        # a further dim_in reduction grid axis (extra accumulator) is needed.
        fixed_bytes = 2 * ((d_in_p * t_hid + t_hid * d_out_p) * wsize
                           + (t_hid + d_out_p) * 4)
        per_row_bytes = (2 * d_in_p * 4 + 2 * d_out_p * 4
                         + d_out_p * 4                      # f32 acc scratch
                         + t_hid * (4 + wsize) + d_out_p * 4)
    else:
        t_hid = None
        fixed_bytes = resident_weight_bytes
        per_row_bytes = per_row_resident

    # ---- one-time zero-padding + casting ------------------------------------
    w1_p = jnp.zeros((d_in_p, d_hid_p), compute_dtype)
    w1_p = w1_p.at[:dim_in, :dim_hidden].set(w1.astype(compute_dtype))
    w2_p = jnp.zeros((d_hid_p, d_out_p), compute_dtype)
    w2_p = w2_p.at[:dim_hidden, :dim_out].set(w2.astype(compute_dtype))
    b1_p = jnp.zeros((1, d_hid_p), jnp.float32)
    b1_p = b1_p.at[:, :dim_hidden].set(b1.reshape(1, -1).astype(jnp.float32))
    b2_p = jnp.zeros((1, d_out_p), jnp.float32)
    b2_p = b2_p.at[:, :dim_out].set(b2.reshape(1, -1).astype(jnp.float32))

    return dict(
        mode=mode, t_hid=t_hid, vmem_budget=int(vmem_budget),
        dim_in=dim_in, dim_hidden=dim_hidden, dim_out=dim_out,
        d_in_p=d_in_p, d_hid_p=d_hid_p, d_out_p=d_out_p,
        fixed_bytes=int(fixed_bytes), per_row_bytes=int(per_row_bytes),
        w1=w1_p, b1=b1_p, w2=w2_p, b2=b2_p,
    )


# -----------------------------------------------------------------------------
# Forward
# -----------------------------------------------------------------------------
def mlp_forward(x_nchw, params, *, max_block_b=512):
    """x_nchw: (B, C, H, W). Returns (B, dim_out) float32."""
    B = x_nchw.shape[0]
    dim_in, dim_out = params["dim_in"], params["dim_out"]
    d_in_p, d_hid_p, d_out_p = params["d_in_p"], params["d_hid_p"], params["d_out_p"]

    x = x_nchw.reshape(B, -1)            # x.view(-1, C*H*W); stays in input dtype
    assert x.shape[1] == dim_in

    # Pad rows only to a multiple of 16 (sublane packing) and lanes to d_in_p.
    # This is a small zero-pad, NOT a pad-to-tm-multiple and NOT a re-cast.
    b_p = _round_up(max(B, 16), 16)
    pad_r, pad_c = b_p - B, d_in_p - dim_in
    if pad_r or pad_c:
        x = jnp.pad(x, ((0, pad_r), (0, pad_c)))

    # Batch tile: as large as the VMEM budget allows; multiple of 16, >= 16.
    tm_cap = (params["vmem_budget"] - params["fixed_bytes"]) // params["per_row_bytes"]
    tm = int(min(max_block_b, max(tm_cap, 16), b_p))
    tm = max(16, (tm // 16) * 16)
    grid_b = pl.cdiv(b_p, tm)

    w1_p, b1_p, w2_p, b2_p = params["w1"], params["b1"], params["w2"], params["b2"]
    out_shape = jax.ShapeDtypeStruct((b_p, d_out_p), jnp.float32)

    cost = pl.CostEstimate(
        flops=2 * b_p * (d_in_p * d_hid_p + d_hid_p * d_out_p),
        transcendentals=0,
        bytes_accessed=int(x.size * x.dtype.itemsize
                           + w1_p.size * w1_p.dtype.itemsize
                           + w2_p.size * w2_p.dtype.itemsize
                           + b1_p.size * 4 + b2_p.size * 4
                           + b_p * d_out_p * 4),
    )
    cparams = pltpu.CompilerParams(
        dimension_semantics=(("parallel",) if params["mode"] == "resident"
                             else ("parallel", "arbitrary")),
        vmem_limit_bytes=params["vmem_budget"],
    )

    if params["mode"] == "resident":
        out_p = pl.pallas_call(
            mlp_resident_kernel,
            out_shape=out_shape,
            grid=(grid_b,),
            in_specs=[
                # activations: tiled over batch rows (double-buffered by Pallas)
                pl.BlockSpec((tm, d_in_p), lambda i: (i, 0)),
                # weights / biases: constant index_map -> fetched once, resident
                pl.BlockSpec((d_in_p, d_hid_p), lambda i: (0, 0)),
                pl.BlockSpec((1, d_hid_p), lambda i: (0, 0)),
                pl.BlockSpec((d_hid_p, d_out_p), lambda i: (0, 0)),
                pl.BlockSpec((1, d_out_p), lambda i: (0, 0)),
            ],
            out_specs=pl.BlockSpec((tm, d_out_p), lambda i: (i, 0)),
            compiler_params=cparams,
            cost_estimate=cost,
        )(x, w1_p, b1_p, w2_p, b2_p)
    else:
        t_hid = params["t_hid"]
        grid_h = d_hid_p // t_hid
        out_p = pl.pallas_call(
            mlp_stream_kernel,
            out_shape=out_shape,
            grid=(grid_b, grid_h),                      # reduction axis last
            in_specs=[
                pl.BlockSpec((tm, d_in_p), lambda i, h: (i, 0)),
                pl.BlockSpec((d_in_p, t_hid), lambda i, h: (0, h)),
                pl.BlockSpec((1, t_hid), lambda i, h: (0, h)),
                pl.BlockSpec((t_hid, d_out_p), lambda i, h: (h, 0)),
                pl.BlockSpec((1, d_out_p), lambda i, h: (0, 0)),
            ],
            out_specs=pl.BlockSpec((tm, d_out_p), lambda i, h: (i, 0)),
            scratch_shapes=[pltpu.VMEM((tm, d_out_p), jnp.float32)],
            compiler_params=cparams,
            cost_estimate=cost,
        )(x, w1_p, b1_p, w2_p, b2_p)

    return out_p[:B, :dim_out]


# -----------------------------------------------------------------------------
# Self-test
# -----------------------------------------------------------------------------
if __name__ == "__main__":
    # Small shapes consistent with the module's forward:
    # x: (B=2, C=4, H=8, W=8) -> dim_in = 4*8*8 = 256
    B, C, H, W = 2, 4, 8, 8
    dim_in = C * H * W
    dim_hidden = 32
    dim_out = 10

    key = jax.random.PRNGKey(0)
    kx, kw1, kb1, kw2, kb2, kw3, kb3, kw4, kb4 = jax.random.split(key, 9)

    x = jax.random.normal(kx, (B, C, H, W), dtype=jnp.float32)
    xf = x.reshape(B, dim_in)

    def linear_init(kw, kb, fan_in, fan_out):
        # PyTorch-Linear-style init, stored as (in, out) for the kernel.
        bound = 1.0 / (fan_in ** 0.5)
        w = jax.random.uniform(kw, (fan_in, fan_out), jnp.float32, -bound, bound)
        b = jax.random.uniform(kb, (fan_out,), jnp.float32, -bound, bound)
        return w, b

    def reference(xf_, w1_, b1_, w2_, b2_):
        # Same bf16-on-MXU / f32-accumulate numerics as the kernel.
        h = jnp.dot(xf_.astype(jnp.bfloat16), w1_.astype(jnp.bfloat16),
                    preferred_element_type=jnp.float32) + b1_
        h = jnp.maximum(h, 0.0)
        return jnp.dot(h.astype(jnp.bfloat16), w2_.astype(jnp.bfloat16),
                       preferred_element_type=jnp.float32) + b2_

    # --- 1) VMEM-resident weights path ----------------------------------------
    w1, b1 = linear_init(kw1, kb1, dim_in, dim_hidden)
    w2, b2 = linear_init(kw2, kb2, dim_hidden, dim_out)
    params = prepare_mlp_params(w1, b1, w2, b2)        # pad + cast once at init
    out = jax.block_until_ready(mlp_forward(x, params))
    assert out.shape == (B, dim_out)
    ref = reference(xf, w1, b1, w2, b2)
    assert jnp.allclose(out, ref, atol=1e-2, rtol=1e-2), \
        float(jnp.max(jnp.abs(out - ref)))
    ref32 = jnp.maximum(xf @ w1 + b1, 0.0) @ w2 + b2
    assert jnp.allclose(out, ref32, atol=1e-1, rtol=1e-1)

    # --- 2) streamed-weights fallback (forced; hidden tiled over 3 grid steps) -
    hid2 = 320                                         # pads to 384 = 3 * 128
    w3, b3 = linear_init(kw3, kb3, dim_in, hid2)
    w4, b4 = linear_init(kw4, kb4, hid2, dim_out)
    params_s = prepare_mlp_params(w3, b3, w4, b4, force_stream=True, t_hid=128)
    assert params_s["mode"] == "stream"
    out_s = jax.block_until_ready(mlp_forward(x, params_s))
    assert out_s.shape == (B, dim_out)
    ref_s = reference(xf, w3, b3, w4, b4)
    assert jnp.allclose(out_s, ref_s, atol=2e-2, rtol=2e-2), \
        float(jnp.max(jnp.abs(out_s - ref_s)))

    print("KERNEL_OK")
</pallas_src>

<mosaic_0001>
module attributes {stable_mosaic.version = 11 : i64} {
  func.func @mlp_resident_kernel(%arg0: i32, %arg1: memref<16x256xf32, #tpu.memory_space<vmem>>, %arg2: memref<256x128xbf16, #tpu.memory_space<vmem>>, %arg3: memref<1x128xf32, #tpu.memory_space<vmem>>, %arg4: memref<128x128xbf16, #tpu.memory_space<vmem>>, %arg5: memref<1x128xf32, #tpu.memory_space<vmem>>, %arg6: memref<16x128xf32, #tpu.memory_space<vmem>>) attributes {dimension_semantics = [#tpu.dimension_semantics<parallel>], iteration_bounds = array<i64: 1>, scalar_prefetch = 0 : i64, scratch_operands = 0 : i64, tpu.core_type = #tpu.core_type<tc>, window_params = [{transform_indices = @transform_0, window_bounds = array<i64: 16, 256>}, {pipeline_mode = #tpu.pipeline_mode<synchronous>, transform_indices = @transform_1, window_bounds = array<i64: 256, 128>}, {pipeline_mode = #tpu.pipeline_mode<synchronous>, transform_indices = @transform_2, window_bounds = array<i64: 1, 128>}, {pipeline_mode = #tpu.pipeline_mode<synchronous>, transform_indices = @transform_3, window_bounds = array<i64: 128, 128>}, {pipeline_mode = #tpu.pipeline_mode<synchronous>, transform_indices = @transform_4, window_bounds = array<i64: 1, 128>}, {transform_indices = @transform_5, window_bounds = array<i64: 16, 128>}]} {
    %c0 = arith.constant 0 : index
    %c0_0 = arith.constant 0 : index
    %0 = vector.load %arg1[%c0, %c0_0] : memref<16x256xf32, #tpu.memory_space<vmem>>, vector<16x256xf32>
    %1 = arith.truncf %0 : vector<16x256xf32> to vector<16x256xbf16>
    %c0_1 = arith.constant 0 : index
    %c0_2 = arith.constant 0 : index
    %2 = vector.load %arg2[%c0_1, %c0_2] : memref<256x128xbf16, #tpu.memory_space<vmem>>, vector<256x128xbf16>
    %cst = arith.constant dense<0.000000e+00> : vector<16x128xf32>
    %3 = tpu.matmul %1, %2, %cst {dimension_numbers = #tpu.dot_dimension_numbers<[1], [0], [0], [1], [0, 0, 1, 1], [], []>} : vector<16x256xbf16>, vector<256x128xbf16>, vector<16x128xf32> -> vector<16x128xf32>
    %c0_3 = arith.constant 0 : index
    %c0_4 = arith.constant 0 : index
    %4 = vector.load %arg3[%c0_3, %c0_4] : memref<1x128xf32, #tpu.memory_space<vmem>>, vector<1x128xf32>
    %5 = vector.broadcast %4 : vector<1x128xf32> to vector<16x128xf32>
    %6 = arith.addf %3, %5 : vector<16x128xf32>
    %cst_5 = arith.constant 0.000000e+00 : f32
    %7 = vector.broadcast %cst_5 : f32 to vector<16x128xf32>
    %8 = arith.maximumf %6, %7 : vector<16x128xf32>
    %9 = arith.truncf %8 : vector<16x128xf32> to vector<16x128xbf16>
    %c0_6 = arith.constant 0 : index
    %c0_7 = arith.constant 0 : index
    %10 = vector.load %arg4[%c0_6, %c0_7] : memref<128x128xbf16, #tpu.memory_space<vmem>>, vector<128x128xbf16>
    %cst_8 = arith.constant dense<0.000000e+00> : vector<16x128xf32>
    %11 = tpu.matmul %9, %10, %cst_8 {dimension_numbers = #tpu.dot_dimension_numbers<[1], [0], [0], [1], [0, 0, 1, 1], [], []>} : vector<16x128xbf16>, vector<128x128xbf16>, vector<16x128xf32> -> vector<16x128xf32>
    %c0_9 = arith.constant 0 : index
    %c0_10 = arith.constant 0 : index
    %12 = vector.load %arg5[%c0_9, %c0_10] : memref<1x128xf32, #tpu.memory_space<vmem>>, vector<1x128xf32>
    %13 = vector.broadcast %12 : vector<1x128xf32> to vector<16x128xf32>
    %14 = arith.addf %11, %13 : vector<16x128xf32>
    %c0_11 = arith.constant 0 : index
    %c0_12 = arith.constant 0 : index
    %15 = vector.load %arg6[%c0_11, %c0_12] : memref<16x128xf32, #tpu.memory_space<vmem>>, vector<16x128xf32>
    tpu.vector_store %arg6[%c0_11, %c0_12], %14 {strides = array<i32>} : memref<16x128xf32, #tpu.memory_space<vmem>>, vector<16x128xf32>,
    return
  }
  func.func @transform_0(%arg0: i32) -> (i32, i32) {
    %c0_i32 = arith.constant 0 : i32
    %c0_i32_0 = arith.constant 0 : i32
    return %arg0, %c0_i32 : i32, i32
  }
  func.func @transform_1(%arg0: i32) -> (i32, i32) {
    %c0_i32 = arith.constant 0 : i32
    %c0_i32_0 = arith.constant 0 : i32
    %c0_i32_1 = arith.constant 0 : i32
    return %c0_i32, %c0_i32_0 : i32, i32
  }
  func.func @transform_2(%arg0: i32) -> (i32, i32) {
    %c0_i32 = arith.constant 0 : i32
    %c0_i32_0 = arith.constant 0 : i32
    %c0_i32_1 = arith.constant 0 : i32
    return %c0_i32, %c0_i32_0 : i32, i32
  }
  func.func @transform_3(%arg0: i32) -> (i32, i32) {
    %c0_i32 = arith.constant 0 : i32
    %c0_i32_0 = arith.constant 0 : i32
    %c0_i32_1 = arith.constant 0 : i32
    return %c0_i32, %c0_i32_0 : i32, i32
  }
  func.func @transform_4(%arg0: i32) -> (i32, i32) {
    %c0_i32 = arith.constant 0 : i32
    %c0_i32_0 = arith.constant 0 : i32
    %c0_i32_1 = arith.constant 0 : i32
    return %c0_i32, %c0_i32_0 : i32, i32
  }
  func.func @transform_5(%arg0: i32) -> (i32, i32) {
    %c0_i32 = arith.constant 0 : i32
    %c0_i32_0 = arith.constant 0 : i32
    return %arg0, %c0_i32 : i32, i32
  }
}

</mosaic_0001>

<llo_original>
// kernel: tpu_custom_call.1
$region0: #{tpu_custom_call.1}
  #allocation0 [shape = 'u32[]', space=smem, size = 0x4, offset = 0x4, fixed_abs, tag = 'smem constant byte address 0x4 - core index']
  #allocation1 [shape = 'u32[144,128]{1,0:T(1,128)}', space=vmem, size = 0x12000, scoped, tag = 'internal scratch']
  %s0 = inlined_call_operand.hbm [shape: f32[16,256], index: 0, kind: input, shape index: {}]
  %s1 = inlined_call_operand.hbm [shape: bf16[256,128], index: 1, kind: input, shape index: {}]
  %s2 = inlined_call_operand.vmem [shape: f32[1,128], index: 2, kind: input, shape index: {}]
  %s3 = inlined_call_operand.hbm [shape: bf16[128,128], index: 3, kind: input, shape index: {}]
  %s4 = inlined_call_operand.vmem [shape: f32[1,128], index: 4, kind: input, shape index: {}]
  %s5 = inlined_call_operand.hbm [shape: f32[16,128], index: 5, kind: output, shape index: {}]
  %s6 = sld [smem:[#allocation0]]
  $region42: #{tpu_custom_call.1} parent=0
    _
  %s8 = ssub.s32 1, %s6
  %s9 = scalar_select 0, %s8, %s6
  $region1: #{tpu_custom_call.1} parent=0
    #allocation2 [shape = 'u8[16384]{0}', space=vmem, size = 0x4000, scoped, tag = 'input window, operand 0, single buffered']
    #allocation3 [shape = 's32[1]{0}', space=sflag, size = 0x4, scoped, tag = 'scoped memory for tpu_custom_call.1']
    #allocation4 [shape = 's32[1]{0}', space=sflag, size = 0x4, scoped, tag = 'scoped memory for tpu_custom_call.1']
    #allocation5 [shape = 'u8[65536]{0}', space=vmem, size = 0x10000, scoped, tag = 'input window, operand 1, single buffered']
    #allocation6 [shape = 's32[1]{0}', space=sflag, size = 0x4, scoped, tag = 'scoped memory for tpu_custom_call.1']
    #allocation7 [shape = 'u8[32768]{0}', space=vmem, size = 0x8000, scoped, tag = 'input window, operand 3, single buffered']
    #allocation8 [shape = 'u8[8192]{0}', space=vmem, size = 0x2000, scoped, tag = 'output window, operand 0, single buffered']
    %10 = vsyncpa [#allocation3], 0
    %11 = vsyncpa [#allocation6], 0
    %12 = vsyncpa [#allocation4], 0
    // Predicated region
    $region2: #{tpu_custom_call.1} parent=1 // pred_check
      _
    $region3: #{tpu_custom_call.1} parent=1 // pred_check_branch
      %14 = sbr.rel (0) target = $region5
    $region4: #{tpu_custom_call.1} parent=1 // pred_region
      %s16 = ssub.s32 512, 512
      %17 = vsyncadd [#allocation3], %s16
      %s18 = sshll.u32 [#allocation2], 4
      %s19 = int_to_ptr.vmem [resolvable:$true] %s18
      %24 = dma.hbm_to_vmem [thread:$0]  %s0, 512, %s19, [#allocation3], 256, 256, 16
    $region5: #{tpu_custom_call.1} parent=1 // pred_fallthru
      _
    // Predicated region
    $region6: #{tpu_custom_call.1} parent=1 // pred_check
      _
    $region7: #{tpu_custom_call.1} parent=1 // pred_check_branch
      %26 = sbr.rel (0) target = $region9
    $region8: #{tpu_custom_call.1} parent=1 // pred_region
      %s28 = ssub.s32 2048, 2048
      %29 = vsyncadd [#allocation6], %s28
      %s30 = sshll.u32 [#allocation5], 4
      %s31 = int_to_ptr.vmem [resolvable:$true] %s30
      %36 = dma.hbm_to_vmem [thread:$0]  %s1, 2048, %s31, [#allocation6], 64, 64, 4
    $region9: #{tpu_custom_call.1} parent=1 // pred_fallthru
      _
    // Predicated region
    $region10: #{tpu_custom_call.1} parent=1 // pred_check
      _
    $region11: #{tpu_custom_call.1} parent=1 // pred_check_branch
      %38 = sbr.rel (0) target = $region13
    $region12: #{tpu_custom_call.1} parent=1 // pred_region
      _
    $region13: #{tpu_custom_call.1} parent=1 // pred_fallthru
      _
    // Predicated region
    $region14: #{tpu_custom_call.1} parent=1 // pred_check
      _
    $region15: #{tpu_custom_call.1} parent=1 // pred_check_branch
      %40 = sbr.rel (0) target = $region17
    $region16: #{tpu_custom_call.1} parent=1 // pred_region
      %s42 = ssub.s32 1024, 1024
      %43 = vsyncadd [#allocation6], %s42
      %s44 = sshll.u32 [#allocation7], 4
      %s45 = int_to_ptr.vmem [resolvable:$true] %s44
      %50 = dma.hbm_to_vmem [thread:$0]  %s3, 1024, %s45, [#allocation6], 64, 64, 4
    $region17: #{tpu_custom_call.1} parent=1 // pred_fallthru
      _
    // Predicated region
    $region18: #{tpu_custom_call.1} parent=1 // pred_check
      _
    $region19: #{tpu_custom_call.1} parent=1 // pred_check_branch
      %52 = sbr.rel (0) target = $region21
    $region20: #{tpu_custom_call.1} parent=1 // pred_region
      _
    $region21: #{tpu_custom_call.1} parent=1 // pred_fallthru
      _
    // Predicated region
    $region22: #{tpu_custom_call.1} parent=1 // pred_check
      _
    $region23: #{tpu_custom_call.1} parent=1 // pred_check_branch
      %54 = sbr.rel (0) target = $region25
    $region24: #{tpu_custom_call.1} parent=1 // pred_region
      %55 = dma.done [#allocation3], 512
    $region25: #{tpu_custom_call.1} parent=1 // pred_fallthru
      _
    // Predicated region
    $region26: #{tpu_custom_call.1} parent=1 // pred_check
      _
    $region27: #{tpu_custom_call.1} parent=1 // pred_check_branch
      %57 = sbr.rel (0) target = $region29
    $region28: #{tpu_custom_call.1} parent=1 // pred_region
      %58 = dma.done [#allocation6], 2048
    $region29: #{tpu_custom_call.1} parent=1 // pred_fallthru
      _
    // Predicated region
    $region30: #{tpu_custom_call.1} parent=1 // pred_check
      _
    $region31: #{tpu_custom_call.1} parent=1 // pred_check_branch
      %60 = sbr.rel (0) target = $region33
    $region32: #{tpu_custom_call.1} parent=1 // pred_region
      %61 = dma.done [#allocation6], 1024
    $region33: #{tpu_custom_call.1} parent=1 // pred_fallthru
      _
    %v63 = vld [vmem:[#allocation2] sm:$0xff]
    %v64 = vld [vmem:[#allocation2 + $0x8] sm:$0xff]
    %v65 = vld [vmem:[#allocation2 + $0x10] sm:$0xff]
    %v66 = vld [vmem:[#allocation2 + $0x18] sm:$0xff]
    %v67 = vpack.c.bf16 %v65, %v63
    %v68 = vpack.c.bf16 %v66, %v64
    %v69 = vld [vmem:[#allocation5] sm:$0xf]
    %v70 = vld [vmem:[#allocation5 + $0x4] sm:$0xf]
    %v71 = vld [vmem:[#allocation5 + $0x8] sm:$0xf]
    %v72 = vld [vmem:[#allocation5 + $0xc] sm:$0xf]
    %v73 = vld [vmem:[#allocation5 + $0x10] sm:$0xf]
    %v74 = vld [vmem:[#allocation5 + $0x14] sm:$0xf]
    %v75 = vld [vmem:[#allocation5 + $0x18] sm:$0xf]
    %v76 = vld [vmem:[#allocation5 + $0x1c] sm:$0xf]
    %v77 = vld [vmem:[#allocation5 + $0x20] sm:$0xf]
    %v78 = vld [vmem:[#allocation5 + $0x24] sm:$0xf]
    %v79 = vld [vmem:[#allocation5 + $0x28] sm:$0xf]
    %v80 = vld [vmem:[#allocation5 + $0x2c] sm:$0xf]
    %v81 = vld [vmem:[#allocation5 + $0x30] sm:$0xf]
    %v82 = vld [vmem:[#allocation5 + $0x34] sm:$0xf]
    %v83 = vld [vmem:[#allocation5 + $0x38] sm:$0xf]
    %v84 = vld [vmem:[#allocation5 + $0x3c] sm:$0xf]
    %v85 = vld [vmem:[#allocation5 + $0x40] sm:$0xf]
    %v86 = vld [vmem:[#allocation5 + $0x44] sm:$0xf]
    %v87 = vld [vmem:[#allocation5 + $0x48] sm:$0xf]
    %v88 = vld [vmem:[#allocation5 + $0x4c] sm:$0xf]
    %v89 = vld [vmem:[#allocation5 + $0x50] sm:$0xf]
    %v90 = vld [vmem:[#allocation5 + $0x54] sm:$0xf]
    %v91 = vld [vmem:[#allocation5 + $0x58] sm:$0xf]
    %v92 = vld [vmem:[#allocation5 + $0x5c] sm:$0xf]
    %v93 = vld [vmem:[#allocation5 + $0x60] sm:$0xf]
    %v94 = vld [vmem:[#allocation5 + $0x64] sm:$0xf]
    %v95 = vld [vmem:[#allocation5 + $0x68] sm:$0xf]
    %v96 = vld [vmem:[#allocation5 + $0x6c] sm:$0xf]
    %v97 = vld [vmem:[#allocation5 + $0x70] sm:$0xf]
    %v98 = vld [vmem:[#allocation5 + $0x74] sm:$0xf]
    %v99 = vld [vmem:[#allocation5 + $0x78] sm:$0xf]
    %v100 = vld [vmem:[#allocation5 + $0x7c] sm:$0xf]
    %v101 = vld [vmem:[%s2] sm:$0x1]
    %v103 = vlaneseq
    %v104 = vshrl.u32 %v103, 7
    %v105 = vsub.s32 0, %v104
    %v106 = vrot.slane %v101, %v105
    %v140 = vunpack.c.l.b16 %v69
    %v141 = vunpack.c.l.b16 %v70
    %v142 = vunpack.c.l.b16 %v71
    %v143 = vunpack.c.l.b16 %v72
    %v144 = vunpack.c.l.b16 %v73
    %v145 = vunpack.c.l.b16 %v74
    %v146 = vunpack.c.l.b16 %v75
    %v147 = vunpack.c.l.b16 %v76
    %v148 = vunpack.c.l.b16 %v77
    %v149 = vunpack.c.l.b16 %v78
    %v150 = vunpack.c.l.b16 %v79
    %v151 = vunpack.c.l.b16 %v80
    %v152 = vunpack.c.l.b16 %v81
    %v153 = vunpack.c.l.b16 %v82
    %v154 = vunpack.c.l.b16 %v83
    %v155 = vunpack.c.l.b16 %v84
    %v156 = vunpack.c.l.b16 %v85
    %v157 = vunpack.c.l.b16 %v86
    %v158 = vunpack.c.l.b16 %v87
    %v159 = vunpack.c.l.b16 %v88
    %v160 = vunpack.c.l.b16 %v89
    %v161 = vunpack.c.l.b16 %v90
    %v162 = vunpack.c.l.b16 %v91
    %v163 = vunpack.c.l.b16 %v92
    %v164 = vunpack.c.l.b16 %v93
    %v165 = vunpack.c.l.b16 %v94
    %v166 = vunpack.c.l.b16 %v95
    %v167 = vunpack.c.l.b16 %v96
    %v168 = vunpack.c.l.b16 %v97
    %v169 = vunpack.c.l.b16 %v98
    %v170 = vunpack.c.l.b16 %v99
    %v171 = vunpack.c.l.b16 %v100
    %v172 = vpack.c.b16 %v141, %v140
    %v173 = vpack.c.b16 %v143, %v142
    %v174 = vpack.c.b16 %v145, %v144
    %v175 = vpack.c.b16 %v147, %v146
    %v176 = vpack.c.b16 %v149, %v148
    %v177 = vpack.c.b16 %v151, %v150
    %v178 = vpack.c.b16 %v153, %v152
    %v179 = vpack.c.b16 %v155, %v154
    %v180 = vpack.c.b16 %v157, %v156
    %v181 = vpack.c.b16 %v159, %v158
    %v182 = vpack.c.b16 %v161, %v160
    %v183 = vpack.c.b16 %v163, %v162
    %v184 = vpack.c.b16 %v165, %v164
    %v185 = vpack.c.b16 %v167, %v166
    %v186 = vpack.c.b16 %v169, %v168
    %v187 = vpack.c.b16 %v171, %v170
    %204 = vmatprep.subr.bf16.mxu0 0
    %205 = vmatpush1.bf16.msra.mxu0 %v172
    %206 = vmatprep.subr.bf16.mxu0 0
    %207 = vmatpush1.bf16.msra.mxu0 %v173
    %208 = vmatprep.subr.bf16.mxu0 0
    %209 = vmatpush1.bf16.msra.mxu0 %v174
    %210 = vmatprep.subr.bf16.mxu0 0
    %211 = vmatpush1.bf16.msra.mxu0 %v175
    %212 = vmatprep.subr.bf16.mxu0 0
    %213 = vmatpush1.bf16.msra.mxu0 %v176
    %214 = vmatprep.subr.bf16.mxu0 0
    %215 = vmatpush1.bf16.msra.mxu0 %v177
    %216 = vmatprep.subr.bf16.mxu0 0
    %217 = vmatpush1.bf16.msra.mxu0 %v178
    %218 = vmatprep.subr.bf16.mxu0 0
    %219 = vmatpush1.bf16.msra.mxu0 %v179
    %220 = vmatprep.subr.bf16.mxu0 0
    %221 = vmatpush1.bf16.msra.mxu0 %v180
    %222 = vmatprep.subr.bf16.mxu0 0
    %223 = vmatpush1.bf16.msra.mxu0 %v181
    %224 = vmatprep.subr.bf16.mxu0 0
    %225 = vmatpush1.bf16.msra.mxu0 %v182
    %226 = vmatprep.subr.bf16.mxu0 0
    %227 = vmatpush1.bf16.msra.mxu0 %v183
    %228 = vmatprep.subr.bf16.mxu0 0
    %229 = vmatpush1.bf16.msra.mxu0 %v184
    %230 = vmatprep.subr.bf16.mxu0 0
    %231 = vmatpush1.bf16.msra.mxu0 %v185
    %232 = vmatprep.subr.bf16.mxu0 0
    %233 = vmatpush1.bf16.msra.mxu0 %v186
    %234 = vmatprep.subr.bf16.mxu0 0
    %235 = vmatpush1.bf16.msra.mxu0 %v187
    %236 = vmatprep.mubr.bf16.mxu0 %v68
    %237 = vmatmul.mubr.bf16.gmra.mrb[0].mxu0 %v67
    %v238 = vpop.f32.mrb[0].mxu0
    %v239 = vadd.f32 %v106, %v238
    %v240 = vpop.f32.mrb[0].mxu0
    %v241 = vpop.f32.mrb[0].mxu0
    %v242 = vadd.f32 %v106, %v241
    %v243 = vpop.f32.mrb[0].mxu0
    %244 = vdwg.mxu0
    %v245 = vmax.f32 %v239, 0.0
    %v246 = vmax.f32 %v242, 0.0
    %v247 = vpack.c.bf16 %v246, %v245
    %v248 = vld [vmem:[#allocation7] sm:$0xf]
    %v249 = vld [vmem:[#allocation7 + $0x4] sm:$0xf]
    %v250 = vld [vmem:[#allocation7 + $0x8] sm:$0xf]
    %v251 = vld [vmem:[#allocation7 + $0xc] sm:$0xf]
    %v252 = vld [vmem:[#allocation7 + $0x10] sm:$0xf]
    %v253 = vld [vmem:[#allocation7 + $0x14] sm:$0xf]
    %v254 = vld [vmem:[#allocation7 + $0x18] sm:$0xf]
    %v255 = vld [vmem:[#allocation7 + $0x1c] sm:$0xf]
    %v256 = vld [vmem:[#allocation7 + $0x20] sm:$0xf]
    %v257 = vld [vmem:[#allocation7 + $0x24] sm:$0xf]
    %v258 = vld [vmem:[#allocation7 + $0x28] sm:$0xf]
    %v259 = vld [vmem:[#allocation7 + $0x2c] sm:$0xf]
    %v260 = vld [vmem:[#allocation7 + $0x30] sm:$0xf]
    %v261 = vld [vmem:[#allocation7 + $0x34] sm:$0xf]
    %v262 = vld [vmem:[#allocation7 + $0x38] sm:$0xf]
    %v263 = vld [vmem:[#allocation7 + $0x3c] sm:$0xf]
    %v264 = vld [vmem:[%s4] sm:$0x1]
    %v266 = vlaneseq
    %v267 = vshrl.u32 %v266, 7
    %v268 = vsub.s32 0, %v267
    %v269 = vrot.slane %v264, %v268
    %v287 = vunpack.c.l.b16 %v248
    %v288 = vunpack.c.l.b16 %v249
    %v289 = vunpack.c.l.b16 %v250
    %v290 = vunpack.c.l.b16 %v251
    %v291 = vunpack.c.l.b16 %v252
    %v292 = vunpack.c.l.b16 %v253
    %v293 = vunpack.c.l.b16 %v254
    %v294 = vunpack.c.l.b16 %v255
    %v295 = vunpack.c.l.b16 %v256
    %v296 = vunpack.c.l.b16 %v257
    %v297 = vunpack.c.l.b16 %v258
    %v298 = vunpack.c.l.b16 %v259
    %v299 = vunpack.c.l.b16 %v260
    %v300 = vunpack.c.l.b16 %v261
    %v301 = vunpack.c.l.b16 %v262
    %v302 = vunpack.c.l.b16 %v263
    %v303 = vpack.c.b16 %v288, %v287
    %v304 = vpack.c.b16 %v290, %v289
    %v305 = vpack.c.b16 %v292, %v291
    %v306 = vpack.c.b16 %v294, %v293
    %v307 = vpack.c.b16 %v296, %v295
    %v308 = vpack.c.b16 %v298, %v297
    %v309 = vpack.c.b16 %v300, %v299
    %v310 = vpack.c.b16 %v302, %v301
    %319 = vmatprep.subr.bf16.mxu0 0
    %320 = vmatpush1.bf16.msra.mxu0 %v303
    %321 = vmatprep.subr.bf16.mxu0 0
    %322 = vmatpush1.bf16.msra.mxu0 %v304
    %323 = vmatprep.subr.bf16.mxu0 0
    %324 = vmatpush1.bf16.msra.mxu0 %v305
    %325 = vmatprep.subr.bf16.mxu0 0
    %326 = vmatpush1.bf16.msra.mxu0 %v306
    %327 = vmatprep.subr.bf16.mxu0 0
    %328 = vmatpush1.bf16.msra.mxu0 %v307
    %329 = vmatprep.subr.bf16.mxu0 0
    %330 = vmatpush1.bf16.msra.mxu0 %v308
    %331 = vmatprep.subr.bf16.mxu0 0
    %332 = vmatpush1.bf16.msra.mxu0 %v309
    %333 = vmatprep.subr.bf16.mxu0 0
    %334 = vmatpush1.bf16.msra.mxu0 %v310
    %335 = vmatprep.subr.bf16.mxu0 0
    %336 = vmatpush1.bf16.msra.mxu0 0
    %337 = vmatprep.subr.bf16.mxu0 0
    %338 = vmatpush1.bf16.msra.mxu0 0
    %339 = vmatprep.subr.bf16.mxu0 0
    %340 = vmatpush1.bf16.msra.mxu0 0
    %341 = vmatprep.subr.bf16.mxu0 0
    %342 = vmatpush1.bf16.msra.mxu0 0
    %343 = vmatprep.subr.bf16.mxu0 0
    %344 = vmatpush1.bf16.msra.mxu0 0
    %345 = vmatprep.subr.bf16.mxu0 0
    %346 = vmatpush1.bf16.msra.mxu0 0
    %347 = vmatprep.subr.bf16.mxu0 0
    %348 = vmatpush1.bf16.msra.mxu0 0
    %349 = vmatprep.subr.bf16.mxu0 0
    %350 = vmatpush1.bf16.msra.mxu0 0
    %351 = vmatprep.mubr.bf16.mxu0 0
    %352 = vmatmul.mubr.bf16.gmra.mrb[0].mxu0 %v247
    %v353 = vpop.f32.mrb[0].mxu0
    %v354 = vadd.f32 %v269, %v353
    %v355 = vpop.f32.mrb[0].mxu0
    %v356 = vpop.f32.mrb[0].mxu0
    %v357 = vadd.f32 %v269, %v356
    %v358 = vpop.f32.mrb[0].mxu0
    %359 = vdwg.mxu0
    %360 = vst [vmem:[#allocation8] sm:$0xff] %v354
    %361 = vst [vmem:[#allocation8 + $0x8] sm:$0xff] %v357
    // Predicated region
    $region34: #{tpu_custom_call.1} parent=1 // pred_check
      _
    $region35: #{tpu_custom_call.1} parent=1 // pred_check_branch
      %363 = sbr.rel (0) target = $region37
    $region36: #{tpu_custom_call.1} parent=1 // pred_region
      %s365 = ssub.s32 256, 256
      %366 = vsyncadd [#allocation4], %s365
      %s367 = sshll.u32 [#allocation8], 4
      %s368 = int_to_ptr.vmem [resolvable:$true] %s367
      %373 = dma.vmem_to_hbm [thread:$0]  %s368, 256, %s5, [#allocation4], 128, 128, 8
    $region37: #{tpu_custom_call.1} parent=1 // pred_fallthru
      _
    // Predicated region
    $region38: #{tpu_custom_call.1} parent=1 // pred_check
      _
    $region39: #{tpu_custom_call.1} parent=1 // pred_check_branch
      %375 = sbr.rel (0) target = $region41
    $region40: #{tpu_custom_call.1} parent=1 // pred_region
      %376 = dma.done [#allocation4], 256
    $region41: #{tpu_custom_call.1} parent=1 // pred_fallthru
      _
    %377 = vsyncpa [#allocation3], 1
    %378 = vsyncpa [#allocation6], 1
    %379 = vsyncpa [#allocation4], 1

</llo_original>
